<compile_context>
chip_gen: v7x
topology: tpu7x:2x2x1
jax: 0.10.0
libtpu: 0.0.40
codegen_flags: <defaults>
</compile_context>

<pallas_src>
import functools

import jax
import jax.numpy as jnp
from jax.experimental import pallas as pl
from jax.experimental.pallas import tpu as pltpu

_MIB = 1024 * 1024


def _round_down(v, m):
    return (v // m) * m


def _round_up(v, m):
    return ((v + m - 1) // m) * m


def _vmem_capacity_bytes():
    """Physical VMEM per TensorCore; conservative (v7x-sized) fallback."""
    try:
        return int(pltpu.get_tpu_info().vmem_capacity_bytes)
    except Exception:
        return 64 * _MIB


def _frozen_bn_kernel(x_ref, scale_ref, bias_ref, o_ref):
    # x_ref/o_ref: (TR, TL).  scale_ref/bias_ref broadcast against them:
    #   row layout        : (TR, 1) -> broadcast along lanes
    #   lane-packed layout: (1, TL) -> broadcast along sublanes
    x = x_ref[...].astype(jnp.float32)
    o_ref[...] = (x * scale_ref[...] + bias_ref[...]).astype(o_ref.dtype)


@functools.partial(jax.jit, static_argnames=("block_bytes",))
def frozen_batch_norm_2d(x, weight, bias, running_mean, running_var,
                         block_bytes=None):
    """FrozenBatchNorm2d forward.

    x: (N, C, H, W) NCHW; weight/bias/running_mean/running_var: (C,).
    block_bytes: optional static override of the per-block byte target
    (used by tests to force multi-block grids at small shapes).
    """
    N, C, H, W = x.shape
    HW = H * W
    NC = N * C
    CHW = C * HW
    itemsize = jnp.dtype(x.dtype).itemsize
    sub = 8 * max(1, 4 // itemsize)      # sublane rounding: 8 f32, 16 bf16, 32 int8

    # ---- fold the frozen statistics into per-channel scale / bias (f32) ----
    eps = jnp.float32(1e-5)
    w = weight.astype(jnp.float32)
    b = bias.astype(jnp.float32)
    rm = running_mean.astype(jnp.float32)
    rv = running_var.astype(jnp.float32)
    scale_c = w * jax.lax.rsqrt(rv + eps)          # (C,)
    bias_c = b - rm * scale_c                      # (C,)

    # ---- per-generation byte budget ----
    vmem_cap = _vmem_capacity_bytes()
    if vmem_cap >= 100 * _MIB:                     # v5e / v6e: 128 MiB VMEM
        tgt_block = 8 * _MIB
        vmem_limit = 64 * _MIB
    else:                                          # v7x: 64 MiB VMEM per TC
        tgt_block = 4 * _MIB
        vmem_limit = 48 * _MIB
    if block_bytes is not None:
        tgt_block = int(block_bytes)
    budget = 4 * tgt_block                         # x + out, double-buffered

    # ---- layout selection (lane-density of the output store) ----
    lane_waste = 1.0 - HW / _round_up(HW, 128)
    use_lane_packed = (HW % 128 != 0) and (lane_waste > 0.2)

    if not use_lane_packed:
        # ------- row layout: (N*C, H*W), per-row scale/bias -------
        x2d = x.reshape(NC, HW)
        scale_t = jnp.tile(scale_c, (N,)).reshape(NC, 1)
        bias_t = jnp.tile(bias_c, (N,)).reshape(NC, 1)

        # Lane tile: full HW (contiguous HBM rows) unless it blows the budget.
        lane_cap = max(128, _round_down(tgt_block // (sub * itemsize), 128))
        tl = HW if HW <= lane_cap else lane_cap
        # Row tile: fill the byte budget, counting x+out and the padded
        # (tr,1)->(tr,128) f32 scale/bias blocks, all double-buffered.
        per_row = 2 * 2 * _round_up(tl, 128) * itemsize + 2 * 2 * 128 * 4
        tr_max = max(1, budget // per_row)
        tr = NC if NC <= tr_max else max(sub, _round_down(tr_max, sub))

        grid = (pl.cdiv(NC, tr), pl.cdiv(HW, tl))          # rows outer, HW inner
        slab = pl.BlockSpec((tr, tl), lambda i, j: (i, j))
        tabl = pl.BlockSpec((tr, 1), lambda i, j: (i, 0))  # resident over HW sweep
        out_shape2d = (NC, HW)
        table_bytes = 2 * NC * 4
    else:
        # ------- lane-packed layout: (N, C*H*W), per-lane scale/bias -------
        x2d = x.reshape(N, CHW)
        scale_t = jnp.repeat(scale_c, HW).reshape(1, CHW)
        bias_t = jnp.repeat(bias_c, HW).reshape(1, CHW)

        tr = N if N <= 256 else 256                 # 256 % sub == 0 for all dtypes
        pr = _round_up(tr, sub)
        # Per-lane bytes: x+out blocks (padded rows) + (1,tl)->(8,tl) f32 tables,
        # all double-buffered.
        per_lane = 2 * 2 * pr * itemsize + 2 * 2 * 8 * 4
        lane_cap = max(1, budget // per_lane)
        tl = CHW if CHW <= lane_cap else max(128, _round_down(lane_cap, 128))

        grid = (pl.cdiv(CHW, tl), pl.cdiv(N, tr))          # lanes outer, rows inner
        slab = pl.BlockSpec((tr, tl), lambda j, i: (i, j))
        tabl = pl.BlockSpec((1, tl), lambda j, i: (0, j))  # resident over row sweep
        out_shape2d = (N, CHW)
        table_bytes = 2 * CHW * 4

    cost = pl.CostEstimate(
        flops=2 * N * C * H * W,
        transcendentals=0,
        bytes_accessed=2 * N * C * H * W * itemsize + table_bytes,
    )

    out2d = pl.pallas_call(
        _frozen_bn_kernel,
        out_shape=jax.ShapeDtypeStruct(out_shape2d, x.dtype),
        grid_spec=pltpu.PrefetchScalarGridSpec(
            num_scalar_prefetch=0,
            grid=grid,
            in_specs=[slab, tabl, tabl],
            out_specs=slab,
        ),
        compiler_params=pltpu.CompilerParams(
            dimension_semantics=("parallel", "parallel"),
            vmem_limit_bytes=vmem_limit,
        ),
        cost_estimate=cost,
    )(x2d, scale_t, bias_t)

    return out2d.reshape(N, C, H, W)


def frozen_batch_norm_2d_ref(x, weight, bias, running_mean, running_var):
    # Pure-JAX reference mirroring the PyTorch forward exactly.
    w = weight.reshape(1, -1, 1, 1)
    b = bias.reshape(1, -1, 1, 1)
    rv = running_var.reshape(1, -1, 1, 1)
    rm = running_mean.reshape(1, -1, 1, 1)
    eps = 1e-5
    scale = w * jax.lax.rsqrt(rv + eps)
    bias_ = b - rm * scale
    return x * scale + bias_


if __name__ == "__main__":
    key = jax.random.PRNGKey(0)

    def make_inputs(k, N, C, H, W, dtype):
        kx, kw, kb, km, kv = jax.random.split(k, 5)
        x = jax.random.normal(kx, (N, C, H, W), dtype=jnp.float32).astype(dtype)
        weight = jnp.ones((C,), jnp.float32) + 0.1 * jax.random.normal(kw, (C,), jnp.float32)
        bias = 0.1 * jax.random.normal(kb, (C,), jnp.float32)
        running_mean = 0.05 * jax.random.normal(km, (C,), jnp.float32)
        running_var = jnp.ones((C,), jnp.float32) + 0.1 * jnp.abs(
            jax.random.normal(kv, (C,), jnp.float32))
        return x, weight, bias, running_mean, running_var

    cases = [
        # (shape,            dtype,        block_bytes, tol)
        ((2, 4, 16, 16),     jnp.float32,  None,        1e-5),  # row layout, 1 block
        ((2, 4, 7, 7),       jnp.float32,  None,        1e-5),  # lane-packed (HW=49)
        ((3, 5, 9, 11),      jnp.float32,  None,        1e-5),  # odd dims, lane-packed
        ((2, 16, 32, 32),    jnp.float32,  8 * 1024,    1e-5),  # row layout, grid (4,4)
        ((2, 6, 10, 10),     jnp.float32,  4 * 1024,    1e-5),  # lane-packed, masked edge block
        ((2, 8, 16, 16),     jnp.bfloat16, None,        3e-2),  # bf16 in/out, f32 compute
    ]

    for idx, (shape, dtype, bb, tol) in enumerate(cases):
        key, sk = jax.random.split(key)
        x, w, b, rm, rv = make_inputs(sk, *shape, dtype)
        out = frozen_batch_norm_2d(x, w, b, rm, rv, block_bytes=bb)
        out = jax.block_until_ready(out)
        ref = frozen_batch_norm_2d_ref(x.astype(jnp.float32), w, b, rm, rv)
        assert out.shape == shape, f"bad shape in case {idx}"
        assert jnp.allclose(out.astype(jnp.float32), ref, atol=tol, rtol=tol), \
            f"mismatch vs reference in case {idx}"

    print("KERNEL_OK")
</pallas_src>

<mosaic_0001>
module attributes {stable_mosaic.version = 11 : i64} {
  func.func @_frozen_bn_kernel(%arg0: i32, %arg1: i32, %arg2: memref<8x256xf32, #tpu.memory_space<vmem>>, %arg3: memref<8x1xf32, #tpu.memory_space<vmem>>, %arg4: memref<8x1xf32, #tpu.memory_space<vmem>>, %arg5: memref<8x256xf32, #tpu.memory_space<vmem>>) attributes {dimension_semantics = [#tpu.dimension_semantics<parallel>, #tpu.dimension_semantics<parallel>], iteration_bounds = array<i64: 1, 1>, scalar_prefetch = 0 : i64, scratch_operands = 0 : i64, tpu.core_type = #tpu.core_type<tc>, window_params = [{transform_indices = @transform_0, window_bounds = array<i64: 8, 256>}, {transform_indices = @transform_1, window_bounds = array<i64: 8, 1>}, {transform_indices = @transform_2, window_bounds = array<i64: 8, 1>}, {transform_indices = @transform_3, window_bounds = array<i64: 8, 256>}]} {
    %c0 = arith.constant 0 : index
    %c0_0 = arith.constant 0 : index
    %0 = vector.load %arg2[%c0, %c0_0] : memref<8x256xf32, #tpu.memory_space<vmem>>, vector<8x256xf32>
    %c0_1 = arith.constant 0 : index
    %c0_2 = arith.constant 0 : index
    %1 = vector.load %arg3[%c0_1, %c0_2] : memref<8x1xf32, #tpu.memory_space<vmem>>, vector<8x1xf32>
    %2 = vector.broadcast %1 : vector<8x1xf32> to vector<8x256xf32>
    %3 = arith.mulf %0, %2 : vector<8x256xf32>
    %c0_3 = arith.constant 0 : index
    %c0_4 = arith.constant 0 : index
    %4 = vector.load %arg4[%c0_3, %c0_4] : memref<8x1xf32, #tpu.memory_space<vmem>>, vector<8x1xf32>
    %5 = vector.broadcast %4 : vector<8x1xf32> to vector<8x256xf32>
    %6 = arith.addf %3, %5 : vector<8x256xf32>
    %c0_5 = arith.constant 0 : index
    %c0_6 = arith.constant 0 : index
    %7 = vector.load %arg5[%c0_5, %c0_6] : memref<8x256xf32, #tpu.memory_space<vmem>>, vector<8x256xf32>
    tpu.vector_store %arg5[%c0_5, %c0_6], %6 {strides = array<i32>} : memref<8x256xf32, #tpu.memory_space<vmem>>, vector<8x256xf32>,
    return
  }
  func.func @transform_0(%arg0: i32, %arg1: i32) -> (i32, i32) {
    %c0_i32 = arith.constant 0 : i32
    return %arg0, %arg1 : i32, i32
  }
  func.func @transform_1(%arg0: i32, %arg1: i32) -> (i32, i32) {
    %c0_i32 = arith.constant 0 : i32
    %c0_i32_0 = arith.constant 0 : i32
    return %arg0, %c0_i32 : i32, i32
  }
  func.func @transform_2(%arg0: i32, %arg1: i32) -> (i32, i32) {
    %c0_i32 = arith.constant 0 : i32
    %c0_i32_0 = arith.constant 0 : i32
    return %arg0, %c0_i32 : i32, i32
  }
  func.func @transform_3(%arg0: i32, %arg1: i32) -> (i32, i32) {
    %c0_i32 = arith.constant 0 : i32
    return %arg0, %arg1 : i32, i32
  }
}

</mosaic_0001>

<llo_original>
// kernel: tile.18
$region0: #{tile.18}
  #allocation0 [shape = 's32[1]{0}', space=sflag, size = 0x4, scoped, tag = 'scoped memory for tile.18']
  %s0 = inlined_call_operand.vmem [shape: f32[4], index: 0, kind: input, shape index: {}]
  %s1 = inlined_call_operand.vmem [shape: f32[2,4], index: 1, kind: output, shape index: {}]
  // Predicated region
  $region2: #{tile.18} parent=0 // pred_check
    _
  $region3: #{tile.18} parent=0 // pred_check_branch
    %3 = sbr.rel (0) target = $region5
  $region4: #{tile.18} parent=0 // pred_region
    _
  $region5: #{tile.18} parent=0 // pred_fallthru
    _
  %v4 = vld [vmem:[%s0] ss:$0 sm:$0xff]
  %5 = vst [vmem:[%s1] sm:$0x3] %v4

// kernel: tile.0
$region0: #{tile.0}
  %s0 = inlined_call_operand.vmem [shape: f32[2,4], index: 0, kind: input, shape index: {}]
  %s1 = inlined_call_operand.vmem [shape: f32[8,1], index: 1, kind: output, shape index: {}]
  $region1: #{tile.0} parent=0
    #allocation0 [shape = 'u8[4096]{0}', space=vmem, size = 0x1000, scoped, tag = 'scoped mem for input reshape']
    %s3 = sshllo.u32 0, 2
    %v4 = vld [vmem:[%s0] sm:%s3]
    %5 = vst [vmem:[#allocation0] sm:%s3] %v4
    %v6 = vld [vmem:[#allocation0] sm:$0x3]
    %vm7 = vcmask 7168
    %8 = vst.msk [vmem:[%s1] ss:$4 sm:$0x3] %vm7, %v6
    %v9 = vld [vmem:[#allocation0] sm:$0x3]
    %10 = vrot.lane.b32.xlu0 %v9, 127
    %v11 = vpop.permute.xlu0 %10
    %vm12 = vcmask 7168
    %s13 = scalar_lea.vmem %s1, 1
    %14 = vst.msk [vmem:[%s13] ss:$4 sm:$0x3] %vm12, %v11
    %v15 = vld [vmem:[#allocation0] sm:$0x3]
    %16 = vrot.lane.b32.xlu0 %v15, 126
    %v17 = vpop.permute.xlu0 %16
    %vm18 = vcmask 7168
    %s19 = scalar_lea.vmem %s1, 2
    %20 = vst.msk [vmem:[%s19] ss:$4 sm:$0x3] %vm18, %v17
    %v21 = vld [vmem:[#allocation0] sm:$0x3]
    %22 = vrot.lane.b32.xlu0 %v21, 125
    %v23 = vpop.permute.xlu0 %22
    %vm24 = vcmask 7168
    %s25 = scalar_lea.vmem %s1, 3
    %26 = vst.msk [vmem:[%s25] ss:$4 sm:$0x3] %vm24, %v23

// kernel: frozen_batch_norm_2d.1
$region0: #{frozen_batch_norm_2d.1}
  #allocation0 [shape = 'u32[]', space=smem, size = 0x4, offset = 0x4, fixed_abs, tag = 'smem constant byte address 0x4 - core index']
  #allocation1 [shape = 'u32[144,128]{1,0:T(1,128)}', space=vmem, size = 0x12000, scoped, tag = 'internal scratch']
  %s0 = inlined_call_operand.vmem [shape: f32[8,256], index: 0, kind: input, shape index: {}]
  %s1 = inlined_call_operand.vmem [shape: f32[8,1], index: 1, kind: input, shape index: {}]
  %s2 = inlined_call_operand.vmem [shape: f32[8,1], index: 2, kind: input, shape index: {}]
  %s3 = inlined_call_operand.vmem [shape: f32[8,256], index: 3, kind: output, shape index: {}]
  %s4 = sld [smem:[#allocation0]]
  $region22: #{frozen_batch_norm_2d.1} parent=0
    _
  %s6 = ssub.s32 1, %s4
  %s7 = scalar_select 0, %s6, %s4
  // Predicated region
  $region2: #{frozen_batch_norm_2d.1} parent=0 // pred_check
    _
  $region3: #{frozen_batch_norm_2d.1} parent=0 // pred_check_branch
    %9 = sbr.rel (0) target = $region5
  $region4: #{frozen_batch_norm_2d.1} parent=0 // pred_region
    _
  $region5: #{frozen_batch_norm_2d.1} parent=0 // pred_fallthru
    _
  // Predicated region
  $region6: #{frozen_batch_norm_2d.1} parent=0 // pred_check
    _
  $region7: #{frozen_batch_norm_2d.1} parent=0 // pred_check_branch
    %11 = sbr.rel (0) target = $region9
  $region8: #{frozen_batch_norm_2d.1} parent=0 // pred_region
    _
  $region9: #{frozen_batch_norm_2d.1} parent=0 // pred_fallthru
    _
  // Predicated region
  $region10: #{frozen_batch_norm_2d.1} parent=0 // pred_check
    _
  $region11: #{frozen_batch_norm_2d.1} parent=0 // pred_check_branch
    %13 = sbr.rel (0) target = $region13
  $region12: #{frozen_batch_norm_2d.1} parent=0 // pred_region
    _
  $region13: #{frozen_batch_norm_2d.1} parent=0 // pred_fallthru
    _
  %v14 = vld [vmem:[%s0] sm:$0xff]
  %v15 = vld [vmem:[%s0 + $0x8] sm:$0xff]
  %v16 = vld [vmem:[%s1] sm:$0xff]
  %18 = vset.pattern.permute.xlu0 0
  %19 = vperm.xlu0 %18, %v16
  %v20 = vpop.permute.xlu0 %19
  %v22 = vmul.f32 %v14, %v20
  %v23 = vmul.f32 %v15, %v20
  %v24 = vld [vmem:[%s2] sm:$0xff]
  %26 = vset.pattern.permute.xlu0 0
  %27 = vperm.xlu0 %26, %v24
  %v28 = vpop.permute.xlu0 %27
  %v30 = vadd.f32 %v22, %v28
  %v31 = vadd.f32 %v23, %v28
  %32 = vst [vmem:[%s3] sm:$0xff] %v30
  %33 = vst [vmem:[%s3 + $0x8] sm:$0xff] %v31
  // Predicated region
  $region14: #{frozen_batch_norm_2d.1} parent=0 // pred_check
    _
  $region15: #{frozen_batch_norm_2d.1} parent=0 // pred_check_branch
    %35 = sbr.rel (0) target = $region17
  $region16: #{frozen_batch_norm_2d.1} parent=0 // pred_region
    _
  $region17: #{frozen_batch_norm_2d.1} parent=0 // pred_fallthru
    _
  // Predicated region
  $region18: #{frozen_batch_norm_2d.1} parent=0 // pred_check
    _
  $region19: #{frozen_batch_norm_2d.1} parent=0 // pred_check_branch
    %37 = sbr.rel (0) target = $region21
  $region20: #{frozen_batch_norm_2d.1} parent=0 // pred_region
    _
  $region21: #{frozen_batch_norm_2d.1} parent=0 // pred_fallthru
    _

</llo_original>
